<compile_context>
chip_gen: v7x
topology: tpu7x:2x2x1
jax: 0.10.0
libtpu: 0.0.40
codegen_flags: <defaults>
</compile_context>

<pallas_src>
import math
import jax
import jax.numpy as jnp
from jax.experimental import pallas as pl
from jax.experimental.pallas import tpu as pltpu


def lrelu_linear_kernel(x_ref, w_ref, b_ref, o_ref, acc_ref):
    # x_ref: (tm, tk)  w_ref: (tk, tn)  b_ref: (1, tn)  o_ref: (tm, tn)
    # acc_ref: (tm, tn) f32 VMEM scratch, resident across the K grid axis.
    k = pl.program_id(2)

    @pl.when(k == 0)
    def _init():
        # Fold the bias into the accumulator init (no separate add later).
        acc_ref[...] = jnp.broadcast_to(
            b_ref[...].astype(jnp.float32), acc_ref.shape
        )

    acc_ref[...] += jnp.dot(
        x_ref[...], w_ref[...], preferred_element_type=jnp.float32
    )

    @pl.when(k == pl.num_programs(2) - 1)
    def _finalize():
        acc = acc_ref[...]
        # LeakyReLU(0.2) == max(x, 0.2*x) for slope in (0,1): 1 mul + 1 max.
        o_ref[...] = jnp.maximum(acc, 0.2 * acc).astype(o_ref.dtype)


def _round_up(v, m):
    return ((v + m - 1) // m) * m


def _pad2d(a, m0, m1):
    """Pad a 2D array up to multiples of (m0, m1). No-op for aligned shapes."""
    p0 = (-a.shape[0]) % m0
    p1 = (-a.shape[1]) % m1
    if p0 or p1:
        a = jnp.pad(a, ((0, p0), (0, p1)))
    return a


def lrelu_layer(x, w_io, bias, *, tm=128, tn=128, tk=256):
    """Fused Linear + LeakyReLU(0.2).

    x:    (B, in_features)
    w_io: (in_features, out_features)  -- weight already stored transposed
          (done once at parameter-init time, NOT per call).
    bias: (out_features,)
    """
    M, K = x.shape
    K2, N = w_io.shape
    assert K == K2, "weight in_features mismatch"
    assert bias.shape == (N,), "bias shape mismatch"

    # Clamp tiles to the (sublane=8 / lane=128)-rounded problem dims so small
    # problems are not padded to full 128/256 tiles.
    tm = min(tm, _round_up(M, 8))
    tn = min(tn, _round_up(N, 128))
    tk = min(tk, _round_up(K, 128))

    # Pad to tile-aligned shapes (no-op when already aligned).
    xp = _pad2d(x, tm, tk)
    wp = _pad2d(w_io, tk, tn)
    bp = _pad2d(bias.reshape(1, N), 1, tn)
    Mp, Kp = xp.shape
    _, Np = wp.shape

    grid = (Mp // tm, Np // tn, Kp // tk)

    # Explicit VMEM budget: double-buffered x/w/bias input tiles,
    # double-buffered output tile, f32 accumulator, plus compiler slack.
    itemsize = jnp.dtype(x.dtype).itemsize
    vmem_bytes = (
        2 * (tm * tk + tk * tn + tn) * itemsize  # pipelined input buffers
        + 2 * tm * tn * itemsize                 # pipelined output buffers
        + tm * tn * 4                            # f32 accumulator scratch
        + (4 << 20)                              # slack for compiler internals
    )
    vmem_limit = int(min(vmem_bytes, 64 * 1024 * 1024))

    cost = pl.CostEstimate(
        flops=2 * Mp * Np * Kp,
        transcendentals=0,
        bytes_accessed=(Mp * Kp + Kp * Np + Np + Mp * Np) * itemsize,
    )

    out = pl.pallas_call(
        lrelu_linear_kernel,
        out_shape=jax.ShapeDtypeStruct((Mp, Np), x.dtype),
        grid_spec=pltpu.PrefetchScalarGridSpec(
            num_scalar_prefetch=0,
            grid=grid,
            in_specs=[
                pl.BlockSpec((tm, tk), lambda i, j, k: (i, k)),  # x tile
                pl.BlockSpec((tk, tn), lambda i, j, k: (k, j)),  # w tile
                pl.BlockSpec((1, tn), lambda i, j, k: (0, j)),   # bias tile
            ],
            out_specs=pl.BlockSpec((tm, tn), lambda i, j, k: (i, j)),
            scratch_shapes=[pltpu.VMEM((tm, tn), jnp.float32)],
        ),
        compiler_params=pltpu.CompilerParams(
            dimension_semantics=("parallel", "parallel", "arbitrary"),
            vmem_limit_bytes=vmem_limit,
        ),
        cost_estimate=cost,
    )(xp, wp, bp)

    if (Mp, Np) != (M, N):
        out = out[:M, :N]
    return out


def init_params(key, in_features, out_features):
    """Deterministic init matching the PyTorch module:
    kaiming_uniform_(weight) (a=0 -> bound = sqrt(6/fan_in)),
    bias ~ U(-1/sqrt(fan_in), 1/sqrt(fan_in)) (nn.Linear default).
    Returns weight in PyTorch (out, in) layout + bias."""
    kw, kb = jax.random.split(key)
    w_bound = math.sqrt(6.0 / in_features)
    weight = jax.random.uniform(
        kw, (out_features, in_features), jnp.float32, -w_bound, w_bound
    )
    b_bound = 1.0 / math.sqrt(in_features)
    bias = jax.random.uniform(kb, (out_features,), jnp.float32, -b_bound, b_bound)
    return weight, bias


def _reference(x, weight, bias):
    y = x @ weight.T + bias
    return jnp.where(y >= 0, y, 0.2 * y)


if __name__ == "__main__":
    key = jax.random.PRNGKey(0)

    # Case 1: small shapes consistent with the module (batch=2, hidden=32->64).
    # Adaptive tiling pads M only to 8 rows here (not 128).
    k_x1, k_p1, k_x2, k_p2 = jax.random.split(key, 4)
    x1 = jax.random.normal(k_x1, (2, 32), jnp.float32)
    w1, b1 = init_params(k_p1, 32, 64)            # PyTorch (out, in) layout
    w1_io = jnp.asarray(w1.T)                     # one-time layout prep
    out1 = lrelu_layer(x1, w1_io, b1)
    jax.block_until_ready(out1)
    assert jnp.allclose(out1, _reference(x1, w1, b1), atol=1e-4, rtol=1e-4), \
        "mismatch vs reference (small)"

    # Case 2: medium lane-dense shapes -> exercises the tiled (M,N,K) grid
    # with a multi-step reduction and the f32 accumulator path.
    x2 = jax.random.normal(k_x2, (384, 512), jnp.float32)
    w2, b2 = init_params(k_p2, 512, 256)
    w2_io = jnp.asarray(w2.T)
    out2 = lrelu_layer(x2, w2_io, b2, tm=128, tn=128, tk=256)
    jax.block_until_ready(out2)
    assert jnp.allclose(out2, _reference(x2, w2, b2), atol=1e-4, rtol=1e-4), \
        "mismatch vs reference (medium)"

    print("KERNEL_OK")
</pallas_src>

<mosaic_0001>
module attributes {stable_mosaic.version = 11 : i64} {
  func.func @lrelu_linear_kernel(%arg0: i32, %arg1: i32, %arg2: i32, %arg3: memref<8x128xf32, #tpu.memory_space<vmem>>, %arg4: memref<128x128xf32, #tpu.memory_space<vmem>>, %arg5: memref<1x128xf32, #tpu.memory_space<vmem>>, %arg6: memref<8x128xf32, #tpu.memory_space<vmem>>, %arg7: memref<8x128xf32, #tpu.memory_space<vmem>>) attributes {dimension_semantics = [#tpu.dimension_semantics<parallel>, #tpu.dimension_semantics<parallel>, #tpu.dimension_semantics<arbitrary>], iteration_bounds = array<i64: 1, 1, 1>, scalar_prefetch = 0 : i64, scratch_operands = 1 : i64, tpu.core_type = #tpu.core_type<tc>, window_params = [{transform_indices = @transform_0, window_bounds = array<i64: 8, 128>}, {transform_indices = @transform_1, window_bounds = array<i64: 128, 128>}, {transform_indices = @transform_2, window_bounds = array<i64: 1, 128>}, {transform_indices = @transform_3, window_bounds = array<i64: 8, 128>}]} {
    %c0_i32 = arith.constant 0 : i32
    %0 = arith.cmpi eq, %arg2, %c0_i32 : i32
    %1 = arith.extui %0 : i1 to i32
    %c0_i32_0 = arith.constant 0 : i32
    %2 = arith.cmpi ne, %1, %c0_i32_0 : i32
    scf.if %2 {
      %c0_10 = arith.constant 0 : index
      %c0_11 = arith.constant 0 : index
      %12 = vector.load %arg5[%c0_10, %c0_11] : memref<1x128xf32, #tpu.memory_space<vmem>>, vector<1x128xf32>
      %13 = vector.shape_cast %12 : vector<1x128xf32> to vector<1x128xf32>
      %14 = vector.broadcast %13 : vector<1x128xf32> to vector<8x128xf32>
      %c0_12 = arith.constant 0 : index
      %c0_13 = arith.constant 0 : index
      %15 = vector.load %arg7[%c0_12, %c0_13] : memref<8x128xf32, #tpu.memory_space<vmem>>, vector<8x128xf32>
      tpu.vector_store %arg7[%c0_12, %c0_13], %14 {strides = array<i32>} : memref<8x128xf32, #tpu.memory_space<vmem>>, vector<8x128xf32>,
    } else {
    }
    %c0 = arith.constant 0 : index
    %c0_1 = arith.constant 0 : index
    %3 = vector.load %arg7[%c0, %c0_1] : memref<8x128xf32, #tpu.memory_space<vmem>>, vector<8x128xf32>
    %c0_2 = arith.constant 0 : index
    %c0_3 = arith.constant 0 : index
    %4 = vector.load %arg3[%c0_2, %c0_3] : memref<8x128xf32, #tpu.memory_space<vmem>>, vector<8x128xf32>
    %c0_4 = arith.constant 0 : index
    %c0_5 = arith.constant 0 : index
    %5 = vector.load %arg4[%c0_4, %c0_5] : memref<128x128xf32, #tpu.memory_space<vmem>>, vector<128x128xf32>
    %cst = arith.constant dense<0.000000e+00> : vector<8x128xf32>
    %6 = tpu.matmul %4, %5, %cst {dimension_numbers = #tpu.dot_dimension_numbers<[1], [0], [0], [1], [0, 0, 1, 1], [], []>} : vector<8x128xf32>, vector<128x128xf32>, vector<8x128xf32> -> vector<8x128xf32>
    %7 = arith.addf %3, %6 : vector<8x128xf32>
    %c0_6 = arith.constant 0 : index
    %c0_7 = arith.constant 0 : index
    %8 = vector.load %arg7[%c0_6, %c0_7] : memref<8x128xf32, #tpu.memory_space<vmem>>, vector<8x128xf32>
    tpu.vector_store %arg7[%c0_6, %c0_7], %7 {strides = array<i32>} : memref<8x128xf32, #tpu.memory_space<vmem>>, vector<8x128xf32>,
    %c0_i32_8 = arith.constant 0 : i32
    %9 = arith.cmpi eq, %arg2, %c0_i32_8 : i32
    %10 = arith.extui %9 : i1 to i32
    %c0_i32_9 = arith.constant 0 : i32
    %11 = arith.cmpi ne, %10, %c0_i32_9 : i32
    scf.if %11 {
      %c0_10 = arith.constant 0 : index
      %c0_11 = arith.constant 0 : index
      %12 = vector.load %arg7[%c0_10, %c0_11] : memref<8x128xf32, #tpu.memory_space<vmem>>, vector<8x128xf32>
      %cst_12 = arith.constant 2.000000e-01 : f32
      %13 = vector.broadcast %cst_12 : f32 to vector<8x128xf32>
      %14 = arith.mulf %13, %12 : vector<8x128xf32>
      %15 = arith.maximumf %12, %14 : vector<8x128xf32>
      %c0_13 = arith.constant 0 : index
      %c0_14 = arith.constant 0 : index
      %16 = vector.load %arg6[%c0_13, %c0_14] : memref<8x128xf32, #tpu.memory_space<vmem>>, vector<8x128xf32>
      tpu.vector_store %arg6[%c0_13, %c0_14], %15 {strides = array<i32>} : memref<8x128xf32, #tpu.memory_space<vmem>>, vector<8x128xf32>,
    } else {
    }
    return
  }
  func.func @transform_0(%arg0: i32, %arg1: i32, %arg2: i32) -> (i32, i32) {
    %c0_i32 = arith.constant 0 : i32
    return %arg0, %arg2 : i32, i32
  }
  func.func @transform_1(%arg0: i32, %arg1: i32, %arg2: i32) -> (i32, i32) {
    %c0_i32 = arith.constant 0 : i32
    return %arg2, %arg1 : i32, i32
  }
  func.func @transform_2(%arg0: i32, %arg1: i32, %arg2: i32) -> (i32, i32) {
    %c0_i32 = arith.constant 0 : i32
    %c0_i32_0 = arith.constant 0 : i32
    return %c0_i32, %arg1 : i32, i32
  }
  func.func @transform_3(%arg0: i32, %arg1: i32, %arg2: i32) -> (i32, i32) {
    %c0_i32 = arith.constant 0 : i32
    return %arg0, %arg1 : i32, i32
  }
}

</mosaic_0001>

<llo_original>
// kernel: tpu_custom_call.1
$region0: #{tpu_custom_call.1}
  #allocation0 [shape = 'u32[]', space=smem, size = 0x4, offset = 0x4, fixed_abs, tag = 'smem constant byte address 0x4 - core index']
  #allocation1 [shape = 'u32[144,128]{1,0:T(1,128)}', space=vmem, size = 0x12000, scoped, tag = 'internal scratch']
  #allocation2 [shape = 'f32[8,128]{1,0:T(8,128)}', space=vmem, size = 0x1000, scoped, tag = 'scratch operand']
  %s0 = inlined_call_operand.hbm [shape: f32[8,128], index: 0, kind: input, shape index: {}]
  %s1 = inlined_call_operand.hbm [shape: f32[128,128], index: 1, kind: input, shape index: {}]
  %s2 = inlined_call_operand.vmem [shape: f32[1,128], index: 2, kind: input, shape index: {}]
  %s3 = inlined_call_operand.hbm [shape: f32[8,128], index: 3, kind: output, shape index: {}]
  %s4 = sld [smem:[#allocation0]]
  $region38: #{tpu_custom_call.1} parent=0
    _
  %s6 = ssub.s32 1, %s4
  %s7 = scalar_select 0, %s6, %s4
  $region1: #{tpu_custom_call.1} parent=0
    #allocation3 [shape = 'u8[4096]{0}', space=vmem, size = 0x1000, scoped, tag = 'input window, operand 0, single buffered']
    #allocation4 [shape = 's32[1]{0}', space=sflag, size = 0x4, scoped, tag = 'scoped memory for tpu_custom_call.1']
    #allocation5 [shape = 's32[1]{0}', space=sflag, size = 0x4, scoped, tag = 'scoped memory for tpu_custom_call.1']
    #allocation6 [shape = 'u8[65536]{0}', space=vmem, size = 0x10000, scoped, tag = 'input window, operand 1, single buffered']
    #allocation7 [shape = 's32[1]{0}', space=sflag, size = 0x4, scoped, tag = 'scoped memory for tpu_custom_call.1']
    #allocation8 [shape = 'u8[4096]{0}', space=vmem, size = 0x1000, scoped, tag = 'output window, operand 0, single buffered']
    %8 = vsyncpa [#allocation4], 0
    %9 = vsyncpa [#allocation7], 0
    %10 = vsyncpa [#allocation5], 0
    // Predicated region
    $region2: #{tpu_custom_call.1} parent=1 // pred_check
      _
    $region3: #{tpu_custom_call.1} parent=1 // pred_check_branch
      %12 = sbr.rel (0) target = $region5
    $region4: #{tpu_custom_call.1} parent=1 // pred_region
      %s14 = ssub.s32 128, 128
      %15 = vsyncadd [#allocation4], %s14
      %s17 = sshll.u32 [#allocation3], 4
      %s18 = int_to_ptr.vmem [resolvable:$true] %s17
      %20 = dma.hbm_to_vmem [thread:$0]  %s0, 128, %s18, [#allocation4]
    $region5: #{tpu_custom_call.1} parent=1 // pred_fallthru
      _
    // Predicated region
    $region6: #{tpu_custom_call.1} parent=1 // pred_check
      _
    $region7: #{tpu_custom_call.1} parent=1 // pred_check_branch
      %22 = sbr.rel (0) target = $region9
    $region8: #{tpu_custom_call.1} parent=1 // pred_region
      %s24 = ssub.s32 2048, 2048
      %25 = vsyncadd [#allocation7], %s24
      %s26 = sshll.u32 [#allocation6], 4
      %s27 = int_to_ptr.vmem [resolvable:$true] %s26
      %32 = dma.hbm_to_vmem [thread:$0]  %s1, 2048, %s27, [#allocation7], 128, 128, 8
    $region9: #{tpu_custom_call.1} parent=1 // pred_fallthru
      _
    // Predicated region
    $region10: #{tpu_custom_call.1} parent=1 // pred_check
      _
    $region11: #{tpu_custom_call.1} parent=1 // pred_check_branch
      %34 = sbr.rel (0) target = $region13
    $region12: #{tpu_custom_call.1} parent=1 // pred_region
      _
    $region13: #{tpu_custom_call.1} parent=1 // pred_fallthru
      _
    // Predicated region
    $region14: #{tpu_custom_call.1} parent=1 // pred_check
      _
    $region15: #{tpu_custom_call.1} parent=1 // pred_check_branch
      %36 = sbr.rel (0) target = $region17
    $region16: #{tpu_custom_call.1} parent=1 // pred_region
      %37 = dma.done [#allocation4], 128
    $region17: #{tpu_custom_call.1} parent=1 // pred_fallthru
      _
    // Predicated region
    $region18: #{tpu_custom_call.1} parent=1 // pred_check
      _
    $region19: #{tpu_custom_call.1} parent=1 // pred_check_branch
      %39 = sbr.rel (0) target = $region21
    $region20: #{tpu_custom_call.1} parent=1 // pred_region
      %40 = dma.done [#allocation7], 2048
    $region21: #{tpu_custom_call.1} parent=1 // pred_fallthru
      _
    %p41 = scmp.eq.s32.totalorder 0, 0
    // Predicated region
    $region22: #{tpu_custom_call.1} parent=1 // pred_check
      %p42 = pneg %p41
    $region23: #{tpu_custom_call.1} parent=1 // pred_check_branch
      %44 = sbr.rel (%p42) target = $region25
    $region24: #{tpu_custom_call.1} parent=1 // pred_region
      %v45 = vld [vmem:[%s2] sm:$0x1]
      %v47 = vlaneseq
      %v48 = vshrl.u32 %v47, 7
      %v49 = vsub.s32 0, %v48
      %v50 = vrot.slane %v45, %v49
      %52 = vst [vmem:[#allocation2] sm:$0xff] %v50
    $region25: #{tpu_custom_call.1} parent=1 // pred_fallthru
      _
    %v53 = vld [vmem:[#allocation2] sm:$0xff]
    %v54 = vld [vmem:[#allocation3] sm:$0xff]
    %v55 = vld [vmem:[#allocation6] sm:$0xff]
    %v56 = vld [vmem:[#allocation6 + $0x8] sm:$0xff]
    %v57 = vld [vmem:[#allocation6 + $0x10] sm:$0xff]
    %v58 = vld [vmem:[#allocation6 + $0x18] sm:$0xff]
    %v59 = vld [vmem:[#allocation6 + $0x20] sm:$0xff]
    %v60 = vld [vmem:[#allocation6 + $0x28] sm:$0xff]
    %v61 = vld [vmem:[#allocation6 + $0x30] sm:$0xff]
    %v62 = vld [vmem:[#allocation6 + $0x38] sm:$0xff]
    %v63 = vld [vmem:[#allocation6 + $0x40] sm:$0xff]
    %v64 = vld [vmem:[#allocation6 + $0x48] sm:$0xff]
    %v65 = vld [vmem:[#allocation6 + $0x50] sm:$0xff]
    %v66 = vld [vmem:[#allocation6 + $0x58] sm:$0xff]
    %v67 = vld [vmem:[#allocation6 + $0x60] sm:$0xff]
    %v68 = vld [vmem:[#allocation6 + $0x68] sm:$0xff]
    %v69 = vld [vmem:[#allocation6 + $0x70] sm:$0xff]
    %v70 = vld [vmem:[#allocation6 + $0x78] sm:$0xff]
    %71 = vmatprep.subr.mxu0 0.0
    %72 = vmatpush1.msra.mxu0 %v55
    %73 = vmatprep.subr.mxu0 0.0
    %74 = vmatpush1.msra.mxu0 %v56
    %75 = vmatprep.subr.mxu0 0.0
    %76 = vmatpush1.msra.mxu0 %v57
    %77 = vmatprep.subr.mxu0 0.0
    %78 = vmatpush1.msra.mxu0 %v58
    %79 = vmatprep.subr.mxu0 0.0
    %80 = vmatpush1.msra.mxu0 %v59
    %81 = vmatprep.subr.mxu0 0.0
    %82 = vmatpush1.msra.mxu0 %v60
    %83 = vmatprep.subr.mxu0 0.0
    %84 = vmatpush1.msra.mxu0 %v61
    %85 = vmatprep.subr.mxu0 0.0
    %86 = vmatpush1.msra.mxu0 %v62
    %87 = vmatprep.subr.mxu0 0.0
    %88 = vmatpush1.msra.mxu0 %v63
    %89 = vmatprep.subr.mxu0 0.0
    %90 = vmatpush1.msra.mxu0 %v64
    %91 = vmatprep.subr.mxu0 0.0
    %92 = vmatpush1.msra.mxu0 %v65
    %93 = vmatprep.subr.mxu0 0.0
    %94 = vmatpush1.msra.mxu0 %v66
    %95 = vmatprep.subr.mxu0 0.0
    %96 = vmatpush1.msra.mxu0 %v67
    %97 = vmatprep.subr.mxu0 0.0
    %98 = vmatpush1.msra.mxu0 %v68
    %99 = vmatprep.subr.mxu0 0.0
    %100 = vmatpush1.msra.mxu0 %v69
    %101 = vmatprep.subr.mxu0 0.0
    %102 = vmatpush1.msra.mxu0 %v70
    %103 = vmatprep.subr.mxu0 0.0
    %104 = vmatpush1.msra.mxu0 0.0
    %105 = vmatprep.subr.mxu0 0.0
    %106 = vmatpush1.msra.mxu0 0.0
    %107 = vmatprep.subr.mxu0 0.0
    %108 = vmatpush1.msra.mxu0 0.0
    %109 = vmatprep.subr.mxu0 0.0
    %110 = vmatpush1.msra.mxu0 0.0
    %111 = vmatprep.subr.mxu0 0.0
    %112 = vmatpush1.msra.mxu0 0.0
    %113 = vmatprep.subr.mxu0 0.0
    %114 = vmatpush1.msra.mxu0 0.0
    %115 = vmatprep.subr.mxu0 0.0
    %116 = vmatpush1.msra.mxu0 0.0
    %117 = vmatprep.subr.mxu0 0.0
    %118 = vmatpush1.msra.mxu0 0.0
    %119 = vmatprep.subr.mxu0 0.0
    %120 = vmatpush1.msra.mxu0 0.0
    %121 = vmatprep.subr.mxu0 0.0
    %122 = vmatpush1.msra.mxu0 0.0
    %123 = vmatprep.subr.mxu0 0.0
    %124 = vmatpush1.msra.mxu0 0.0
    %125 = vmatprep.subr.mxu0 0.0
    %126 = vmatpush1.msra.mxu0 0.0
    %127 = vmatprep.subr.mxu0 0.0
    %128 = vmatpush1.msra.mxu0 0.0
    %129 = vmatprep.subr.mxu0 0.0
    %130 = vmatpush1.msra.mxu0 0.0
    %131 = vmatprep.subr.mxu0 0.0
    %132 = vmatpush1.msra.mxu0 0.0
    %133 = vmatprep.subr.mxu0 0.0
    %134 = vmatpush1.msra.mxu0 0.0
    %135 = vmatprep.mubr.f32.mxu0 0.0
    %136 = vmatmul.mubr.f32.gmra.mrb[0].mxu0 %v54
    %v137 = vpop.f32.mrb[0].mxu0
    %v138 = vadd.f32 0.0, %v137
    %v139 = vpop.f32.mrb[0].mxu0
    %140 = vdwg.mxu0
    %v141 = vadd.f32 %v53, %v138
    %142 = vst [vmem:[#allocation2] sm:$0xff] %v141
    // Predicated region
    $region26: #{tpu_custom_call.1} parent=1 // pred_check
      %p143 = pneg %p41
    $region27: #{tpu_custom_call.1} parent=1 // pred_check_branch
      %145 = sbr.rel (%p143) target = $region29
    $region28: #{tpu_custom_call.1} parent=1 // pred_region
      %v146 = vld [vmem:[#allocation2] sm:$0xff]
      %v147 = vmul.f32 %v146, 0.2
      %v148 = vmax.f32 %v146, %v147
      %149 = vst [vmem:[#allocation8] sm:$0xff] %v148
    $region29: #{tpu_custom_call.1} parent=1 // pred_fallthru
      _
    // Predicated region
    $region30: #{tpu_custom_call.1} parent=1 // pred_check
      _
    $region31: #{tpu_custom_call.1} parent=1 // pred_check_branch
      %151 = sbr.rel (0) target = $region33
    $region32: #{tpu_custom_call.1} parent=1 // pred_region
      %s153 = ssub.s32 128, 128
      %154 = vsyncadd [#allocation5], %s153
      %s156 = sshll.u32 [#allocation8], 4
      %s157 = int_to_ptr.vmem [resolvable:$true] %s156
      %159 = dma.vmem_to_hbm [thread:$0]  %s157, 128, %s3, [#allocation5]
    $region33: #{tpu_custom_call.1} parent=1 // pred_fallthru
      _
    // Predicated region
    $region34: #{tpu_custom_call.1} parent=1 // pred_check
      _
    $region35: #{tpu_custom_call.1} parent=1 // pred_check_branch
      %161 = sbr.rel (0) target = $region37
    $region36: #{tpu_custom_call.1} parent=1 // pred_region
      %162 = dma.done [#allocation5], 128
    $region37: #{tpu_custom_call.1} parent=1 // pred_fallthru
      _
    %163 = vsyncpa [#allocation4], 1
    %164 = vsyncpa [#allocation7], 1
    %165 = vsyncpa [#allocation5], 1

</llo_original>
